<compile_context>
chip_gen: v6e
topology: v6e:2x2x1
jax: 0.10.0
libtpu: 0.0.40
codegen_flags: <defaults>
</compile_context>

<pallas_src>
import jax
import jax.numpy as jnp
from jax.experimental import pallas as pl
from jax.experimental.pallas import tpu as pltpu

IN_DIM = 84
IN_DIM_PAD = 128          # lane-aligned input feature dim (zero-padded)
HID_DIM = 512
OUT_DIM = 256
TILE_B = 256              # default batch tile (multiple of 128 keeps MXU full)


def _mlp_kernel(x_ref, w1_ref, b1_ref, w2_ref, b2_ref, o_ref):
    # fc1 + bias + ReLU: bf16 operands, f32 MXU accumulation.
    h = jnp.dot(x_ref[...], w1_ref[...], preferred_element_type=jnp.float32)
    h = jnp.maximum(h + b1_ref[...], 0.0)
    # fc2 + bias + ReLU: re-cast hidden activations to bf16 for the MXU.
    o = jnp.dot(h.astype(jnp.bfloat16), w2_ref[...],
                preferred_element_type=jnp.float32)
    o_ref[...] = jnp.maximum(o + b2_ref[...], 0.0).astype(o_ref.dtype)


def projection_head(x, w1, b1, w2, b2, *, tile_b=TILE_B):
    """x: (B, 84) f32 -> (B, 256) f32. Weights (in, out), biases (1, out)."""
    B = x.shape[0]

    # Shrink the batch tile for small batches (keep it a multiple of 8).
    tile_b = min(tile_b, ((B + 7) // 8) * 8)
    n_tiles = pl.cdiv(B, tile_b)
    B_pad = n_tiles * tile_b

    # bf16 operands for the MXU (halves DMA bytes too); biases stay f32.
    # Zero-pad the feature dim 84 -> 128 (lane aligned); pad batch to B_pad.
    x_bf = jnp.pad(x.astype(jnp.bfloat16),
                   ((0, B_pad - B), (0, IN_DIM_PAD - IN_DIM)))
    w1_bf = jnp.pad(w1.astype(jnp.bfloat16), ((0, IN_DIM_PAD - IN_DIM), (0, 0)))
    w2_bf = w2.astype(jnp.bfloat16)

    out = pl.pallas_call(
        _mlp_kernel,
        out_shape=jax.ShapeDtypeStruct((B_pad, OUT_DIM), jnp.float32),
        grid=(n_tiles,),
        in_specs=[
            # batch-tiled activations (auto double-buffered / pipelined)
            pl.BlockSpec((tile_b, IN_DIM_PAD), lambda i: (i, 0)),
            # weights / biases: same block every step -> resident in VMEM
            pl.BlockSpec((IN_DIM_PAD, HID_DIM), lambda i: (0, 0)),
            pl.BlockSpec((1, HID_DIM), lambda i: (0, 0)),
            pl.BlockSpec((HID_DIM, OUT_DIM), lambda i: (0, 0)),
            pl.BlockSpec((1, OUT_DIM), lambda i: (0, 0)),
        ],
        out_specs=pl.BlockSpec((tile_b, OUT_DIM), lambda i: (i, 0)),
        compiler_params=pltpu.CompilerParams(
            dimension_semantics=("parallel",),
            vmem_limit_bytes=32 * 1024 * 1024,
        ),
    )(x_bf, w1_bf, b1, w2_bf, b2)

    return out[:B]


def init_params(key):
    """Deterministic init mimicking nn.Linear default: U(-1/sqrt(fan_in), +)."""
    k1, k2, k3, k4 = jax.random.split(key, 4)
    bound1 = 1.0 / jnp.sqrt(jnp.float32(IN_DIM))
    bound2 = 1.0 / jnp.sqrt(jnp.float32(HID_DIM))
    w1 = jax.random.uniform(k1, (IN_DIM, HID_DIM), jnp.float32, -bound1, bound1)
    b1 = jax.random.uniform(k2, (1, HID_DIM), jnp.float32, -bound1, bound1)
    w2 = jax.random.uniform(k3, (HID_DIM, OUT_DIM), jnp.float32, -bound2, bound2)
    b2 = jax.random.uniform(k4, (1, OUT_DIM), jnp.float32, -bound2, bound2)
    return w1, b1, w2, b2


if __name__ == "__main__":
    key = jax.random.PRNGKey(0)
    kx, kp = jax.random.split(key)
    B = 8  # small example batch (kernel shrinks its batch tile accordingly)
    x = jax.random.normal(kx, (B, IN_DIM), jnp.float32)
    w1, b1, w2, b2 = init_params(kp)

    out = jax.block_until_ready(projection_head(x, w1, b1, w2, b2))
    assert out.shape == (B, OUT_DIM), out.shape

    # Reference using the same bf16-operand / f32-accumulate recipe (tight check).
    ref_h = jnp.maximum(
        jnp.dot(x.astype(jnp.bfloat16), w1.astype(jnp.bfloat16),
                preferred_element_type=jnp.float32) + b1, 0.0)
    ref = jnp.maximum(
        jnp.dot(ref_h.astype(jnp.bfloat16), w2.astype(jnp.bfloat16),
                preferred_element_type=jnp.float32) + b2, 0.0)
    assert jnp.allclose(out, ref, atol=1e-2, rtol=1e-2), "mismatch vs bf16 reference"

    # Loose sanity check against the pure-f32 reference (bf16 rounding slack).
    ref32 = jnp.maximum(jnp.maximum(x @ w1 + b1, 0.0) @ w2 + b2, 0.0)
    assert jnp.allclose(out, ref32, atol=1e-1, rtol=1e-1), "mismatch vs f32 reference"

    print("KERNEL_OK")
</pallas_src>

<mosaic_0001>
module attributes {stable_mosaic.version = 11 : i64} {
  func.func @_mlp_kernel(%arg0: i32, %arg1: memref<8x128xbf16, #tpu.memory_space<vmem>>, %arg2: memref<128x512xbf16, #tpu.memory_space<vmem>>, %arg3: memref<1x512xf32, #tpu.memory_space<vmem>>, %arg4: memref<512x256xbf16, #tpu.memory_space<vmem>>, %arg5: memref<1x256xf32, #tpu.memory_space<vmem>>, %arg6: memref<8x256xf32, #tpu.memory_space<vmem>>) attributes {dimension_semantics = [#tpu.dimension_semantics<parallel>], iteration_bounds = array<i64: 1>, scalar_prefetch = 0 : i64, scratch_operands = 0 : i64, tpu.core_type = #tpu.core_type<tc>, window_params = [{transform_indices = @transform_0, window_bounds = array<i64: 8, 128>}, {pipeline_mode = #tpu.pipeline_mode<synchronous>, transform_indices = @transform_1, window_bounds = array<i64: 128, 512>}, {pipeline_mode = #tpu.pipeline_mode<synchronous>, transform_indices = @transform_2, window_bounds = array<i64: 1, 512>}, {pipeline_mode = #tpu.pipeline_mode<synchronous>, transform_indices = @transform_3, window_bounds = array<i64: 512, 256>}, {pipeline_mode = #tpu.pipeline_mode<synchronous>, transform_indices = @transform_4, window_bounds = array<i64: 1, 256>}, {transform_indices = @transform_5, window_bounds = array<i64: 8, 256>}]} {
    %c0 = arith.constant 0 : index
    %c0_0 = arith.constant 0 : index
    %0 = vector.load %arg1[%c0, %c0_0] : memref<8x128xbf16, #tpu.memory_space<vmem>>, vector<8x128xbf16>
    %c0_1 = arith.constant 0 : index
    %c0_2 = arith.constant 0 : index
    %1 = vector.load %arg2[%c0_1, %c0_2] : memref<128x512xbf16, #tpu.memory_space<vmem>>, vector<128x512xbf16>
    %cst = arith.constant dense<0.000000e+00> : vector<8x512xf32>
    %2 = tpu.matmul %0, %1, %cst {dimension_numbers = #tpu.dot_dimension_numbers<[1], [0], [0], [1], [0, 0, 1, 1], [], []>} : vector<8x128xbf16>, vector<128x512xbf16>, vector<8x512xf32> -> vector<8x512xf32>
    %c0_3 = arith.constant 0 : index
    %c0_4 = arith.constant 0 : index
    %3 = vector.load %arg3[%c0_3, %c0_4] : memref<1x512xf32, #tpu.memory_space<vmem>>, vector<1x512xf32>
    %4 = vector.broadcast %3 : vector<1x512xf32> to vector<8x512xf32>
    %5 = arith.addf %2, %4 : vector<8x512xf32>
    %cst_5 = arith.constant 0.000000e+00 : f32
    %6 = vector.broadcast %cst_5 : f32 to vector<8x512xf32>
    %7 = arith.maximumf %5, %6 : vector<8x512xf32>
    %8 = arith.truncf %7 : vector<8x512xf32> to vector<8x512xbf16>
    %c0_6 = arith.constant 0 : index
    %c0_7 = arith.constant 0 : index
    %9 = vector.load %arg4[%c0_6, %c0_7] : memref<512x256xbf16, #tpu.memory_space<vmem>>, vector<512x256xbf16>
    %cst_8 = arith.constant dense<0.000000e+00> : vector<8x256xf32>
    %10 = tpu.matmul %8, %9, %cst_8 {dimension_numbers = #tpu.dot_dimension_numbers<[1], [0], [0], [1], [0, 0, 1, 1], [], []>} : vector<8x512xbf16>, vector<512x256xbf16>, vector<8x256xf32> -> vector<8x256xf32>
    %c0_9 = arith.constant 0 : index
    %c0_10 = arith.constant 0 : index
    %11 = vector.load %arg5[%c0_9, %c0_10] : memref<1x256xf32, #tpu.memory_space<vmem>>, vector<1x256xf32>
    %12 = vector.broadcast %11 : vector<1x256xf32> to vector<8x256xf32>
    %13 = arith.addf %10, %12 : vector<8x256xf32>
    %cst_11 = arith.constant 0.000000e+00 : f32
    %14 = vector.broadcast %cst_11 : f32 to vector<8x256xf32>
    %15 = arith.maximumf %13, %14 : vector<8x256xf32>
    %c0_12 = arith.constant 0 : index
    %c0_13 = arith.constant 0 : index
    %16 = vector.load %arg6[%c0_12, %c0_13] : memref<8x256xf32, #tpu.memory_space<vmem>>, vector<8x256xf32>
    tpu.vector_store %arg6[%c0_12, %c0_13], %15 {strides = array<i32>} : memref<8x256xf32, #tpu.memory_space<vmem>>, vector<8x256xf32>,
    return
  }
  func.func @transform_0(%arg0: i32) -> (i32, i32) {
    %c0_i32 = arith.constant 0 : i32
    %c0_i32_0 = arith.constant 0 : i32
    return %arg0, %c0_i32 : i32, i32
  }
  func.func @transform_1(%arg0: i32) -> (i32, i32) {
    %c0_i32 = arith.constant 0 : i32
    %c0_i32_0 = arith.constant 0 : i32
    %c0_i32_1 = arith.constant 0 : i32
    return %c0_i32, %c0_i32_0 : i32, i32
  }
  func.func @transform_2(%arg0: i32) -> (i32, i32) {
    %c0_i32 = arith.constant 0 : i32
    %c0_i32_0 = arith.constant 0 : i32
    %c0_i32_1 = arith.constant 0 : i32
    return %c0_i32, %c0_i32_0 : i32, i32
  }
  func.func @transform_3(%arg0: i32) -> (i32, i32) {
    %c0_i32 = arith.constant 0 : i32
    %c0_i32_0 = arith.constant 0 : i32
    %c0_i32_1 = arith.constant 0 : i32
    return %c0_i32, %c0_i32_0 : i32, i32
  }
  func.func @transform_4(%arg0: i32) -> (i32, i32) {
    %c0_i32 = arith.constant 0 : i32
    %c0_i32_0 = arith.constant 0 : i32
    %c0_i32_1 = arith.constant 0 : i32
    return %c0_i32, %c0_i32_0 : i32, i32
  }
  func.func @transform_5(%arg0: i32) -> (i32, i32) {
    %c0_i32 = arith.constant 0 : i32
    %c0_i32_0 = arith.constant 0 : i32
    return %arg0, %c0_i32 : i32, i32
  }
}

</mosaic_0001>

<llo_original>
// kernel: tpu_custom_call.1
$region0: #{tpu_custom_call.1}
  #allocation0 [shape = 'u32[]', space=smem, size = 0x4, offset = 0x4, fixed_abs, tag = 'smem constant byte address 0x4 - core index']
  #allocation1 [shape = 'u32[144,128]{1,0:T(1,128)}', space=vmem, size = 0x12000, scoped, tag = 'internal scratch']
  %s0 = inlined_call_operand.hbm [shape: bf16[8,128], index: 0, kind: input, shape index: {}]
  %s1 = inlined_call_operand.hbm [shape: bf16[128,512], index: 1, kind: input, shape index: {}]
  %s2 = inlined_call_operand.hbm [shape: f32[1,512], index: 2, kind: input, shape index: {}]
  %s3 = inlined_call_operand.hbm [shape: bf16[512,256], index: 3, kind: input, shape index: {}]
  %s4 = inlined_call_operand.vmem [shape: f32[1,256], index: 4, kind: input, shape index: {}]
  %s5 = inlined_call_operand.hbm [shape: f32[8,256], index: 5, kind: output, shape index: {}]
  %s6 = sld [smem:[#allocation0]]
  $region46: #{tpu_custom_call.1} parent=0
    _
  %s8 = ssub.s32 1, %s6
  %s9 = scalar_select 0, %s8, %s6
  $region1: #{tpu_custom_call.1} parent=0
    #allocation2 [shape = 'u8[2048]{0}', space=vmem, size = 0x800, scoped, tag = 'input window, operand 0, single buffered']
    #allocation3 [shape = 's32[1]{0}', space=sflag, size = 0x4, scoped, tag = 'scoped memory for tpu_custom_call.1']
    #allocation4 [shape = 's32[1]{0}', space=sflag, size = 0x4, scoped, tag = 'scoped memory for tpu_custom_call.1']
    #allocation5 [shape = 'u8[131072]{0}', space=vmem, size = 0x20000, scoped, tag = 'input window, operand 1, single buffered']
    #allocation6 [shape = 's32[1]{0}', space=sflag, size = 0x4, scoped, tag = 'scoped memory for tpu_custom_call.1']
    #allocation7 [shape = 'u8[2048]{0}', space=vmem, size = 0x800, scoped, tag = 'input window, operand 2, single buffered']
    #allocation8 [shape = 'u8[262144]{0}', space=vmem, size = 0x40000, scoped, tag = 'input window, operand 3, single buffered']
    #allocation9 [shape = 's32[1]{0}', space=sflag, size = 0x4, scoped, tag = 'scoped memory for tpu_custom_call.1']
    #allocation10 [shape = 'u8[8192]{0}', space=vmem, size = 0x2000, scoped, tag = 'output window, operand 0, single buffered']
    %10 = vsyncpa [#allocation3], 0
    %11 = vsyncpa [#allocation6], 0
    %12 = vsyncpa [#allocation9], 0
    %13 = vsyncpa [#allocation4], 0
    // Predicated region
    $region2: #{tpu_custom_call.1} parent=1 // pred_check
      _
    $region3: #{tpu_custom_call.1} parent=1 // pred_check_branch
      %15 = sbr.rel (0) target = $region5
    $region4: #{tpu_custom_call.1} parent=1 // pred_region
      %s17 = ssub.s32 64, 64
      %18 = vsyncadd [#allocation3], %s17
      %s20 = sshll.u32 [#allocation2], 4
      %s21 = int_to_ptr.vmem [resolvable:$true] %s20
      %23 = dma.hbm_to_vmem [thread:$0]  %s0, 64, %s21, [#allocation3]
    $region5: #{tpu_custom_call.1} parent=1 // pred_fallthru
      _
    // Predicated region
    $region6: #{tpu_custom_call.1} parent=1 // pred_check
      _
    $region7: #{tpu_custom_call.1} parent=1 // pred_check_branch
      %25 = sbr.rel (0) target = $region9
    $region8: #{tpu_custom_call.1} parent=1 // pred_region
      %s27 = ssub.s32 4096, 4096
      %28 = vsyncadd [#allocation6], %s27
      %s29 = sshll.u32 [#allocation5], 4
      %s30 = int_to_ptr.vmem [resolvable:$true] %s29
      %35 = dma.hbm_to_vmem [thread:$0]  %s1, 4096, %s30, [#allocation6], 256, 256, 16
    $region9: #{tpu_custom_call.1} parent=1 // pred_fallthru
      _
    // Predicated region
    $region10: #{tpu_custom_call.1} parent=1 // pred_check
      _
    $region11: #{tpu_custom_call.1} parent=1 // pred_check_branch
      %37 = sbr.rel (0) target = $region13
    $region12: #{tpu_custom_call.1} parent=1 // pred_region
      %s39 = ssub.s32 64, 64
      %40 = vsyncadd [#allocation6], %s39
      %s42 = sshll.u32 [#allocation7], 4
      %s43 = int_to_ptr.vmem [resolvable:$true] %s42
      %45 = dma.hbm_to_vmem [thread:$0]  %s2, 64, %s43, [#allocation6]
    $region13: #{tpu_custom_call.1} parent=1 // pred_fallthru
      _
    // Predicated region
    $region14: #{tpu_custom_call.1} parent=1 // pred_check
      _
    $region15: #{tpu_custom_call.1} parent=1 // pred_check_branch
      %47 = sbr.rel (0) target = $region17
    $region16: #{tpu_custom_call.1} parent=1 // pred_region
      %s49 = ssub.s32 8192, 8192
      %50 = vsyncadd [#allocation9], %s49
      %s51 = sshll.u32 [#allocation8], 4
      %s52 = int_to_ptr.vmem [resolvable:$true] %s51
      %57 = dma.hbm_to_vmem [thread:$0]  %s3, 8192, %s52, [#allocation9], 128, 128, 8
    $region17: #{tpu_custom_call.1} parent=1 // pred_fallthru
      _
    // Predicated region
    $region18: #{tpu_custom_call.1} parent=1 // pred_check
      _
    $region19: #{tpu_custom_call.1} parent=1 // pred_check_branch
      %59 = sbr.rel (0) target = $region21
    $region20: #{tpu_custom_call.1} parent=1 // pred_region
      _
    $region21: #{tpu_custom_call.1} parent=1 // pred_fallthru
      _
    // Predicated region
    $region22: #{tpu_custom_call.1} parent=1 // pred_check
      _
    $region23: #{tpu_custom_call.1} parent=1 // pred_check_branch
      %61 = sbr.rel (0) target = $region25
    $region24: #{tpu_custom_call.1} parent=1 // pred_region
      %62 = dma.done [#allocation3], 64
    $region25: #{tpu_custom_call.1} parent=1 // pred_fallthru
      _
    // Predicated region
    $region26: #{tpu_custom_call.1} parent=1 // pred_check
      _
    $region27: #{tpu_custom_call.1} parent=1 // pred_check_branch
      %64 = sbr.rel (0) target = $region29
    $region28: #{tpu_custom_call.1} parent=1 // pred_region
      %65 = dma.done [#allocation6], 4096
    $region29: #{tpu_custom_call.1} parent=1 // pred_fallthru
      _
    // Predicated region
    $region30: #{tpu_custom_call.1} parent=1 // pred_check
      _
    $region31: #{tpu_custom_call.1} parent=1 // pred_check_branch
      %67 = sbr.rel (0) target = $region33
    $region32: #{tpu_custom_call.1} parent=1 // pred_region
      %68 = dma.done [#allocation6], 64
    $region33: #{tpu_custom_call.1} parent=1 // pred_fallthru
      _
    // Predicated region
    $region34: #{tpu_custom_call.1} parent=1 // pred_check
      _
    $region35: #{tpu_custom_call.1} parent=1 // pred_check_branch
      %70 = sbr.rel (0) target = $region37
    $region36: #{tpu_custom_call.1} parent=1 // pred_region
      %71 = dma.done [#allocation9], 8192
    $region37: #{tpu_custom_call.1} parent=1 // pred_fallthru
      _
    %v73 = vld [vmem:[#allocation2] sm:$0xf]
    %v74 = vld [vmem:[#allocation5] sm:$0xff]
    %v75 = vld [vmem:[#allocation5 + $0x8] sm:$0xff]
    %v76 = vld [vmem:[#allocation5 + $0x10] sm:$0xff]
    %v77 = vld [vmem:[#allocation5 + $0x18] sm:$0xff]
    %v78 = vld [vmem:[#allocation5 + $0x20] sm:$0xff]
    %v79 = vld [vmem:[#allocation5 + $0x28] sm:$0xff]
    %v80 = vld [vmem:[#allocation5 + $0x30] sm:$0xff]
    %v81 = vld [vmem:[#allocation5 + $0x38] sm:$0xff]
    %v82 = vld [vmem:[#allocation5 + $0x40] sm:$0xff]
    %v83 = vld [vmem:[#allocation5 + $0x48] sm:$0xff]
    %v84 = vld [vmem:[#allocation5 + $0x50] sm:$0xff]
    %v85 = vld [vmem:[#allocation5 + $0x58] sm:$0xff]
    %v86 = vld [vmem:[#allocation5 + $0x60] sm:$0xff]
    %v87 = vld [vmem:[#allocation5 + $0x68] sm:$0xff]
    %v88 = vld [vmem:[#allocation5 + $0x70] sm:$0xff]
    %v89 = vld [vmem:[#allocation5 + $0x78] sm:$0xff]
    %v90 = vld [vmem:[#allocation5 + $0x80] sm:$0xff]
    %v91 = vld [vmem:[#allocation5 + $0x88] sm:$0xff]
    %v92 = vld [vmem:[#allocation5 + $0x90] sm:$0xff]
    %v93 = vld [vmem:[#allocation5 + $0x98] sm:$0xff]
    %v94 = vld [vmem:[#allocation5 + $0xa0] sm:$0xff]
    %v95 = vld [vmem:[#allocation5 + $0xa8] sm:$0xff]
    %v96 = vld [vmem:[#allocation5 + $0xb0] sm:$0xff]
    %v97 = vld [vmem:[#allocation5 + $0xb8] sm:$0xff]
    %v98 = vld [vmem:[#allocation5 + $0xc0] sm:$0xff]
    %v99 = vld [vmem:[#allocation5 + $0xc8] sm:$0xff]
    %v100 = vld [vmem:[#allocation5 + $0xd0] sm:$0xff]
    %v101 = vld [vmem:[#allocation5 + $0xd8] sm:$0xff]
    %v102 = vld [vmem:[#allocation5 + $0xe0] sm:$0xff]
    %v103 = vld [vmem:[#allocation5 + $0xe8] sm:$0xff]
    %v104 = vld [vmem:[#allocation5 + $0xf0] sm:$0xff]
    %v105 = vld [vmem:[#allocation5 + $0xf8] sm:$0xff]
    %v106 = vld [vmem:[#allocation7] sm:$0xf]
    %v108 = vlaneseq
    %v109 = vshrl.u32 %v108, 7
    %v110 = vsub.s32 0, %v109
    %v111 = vrot.slane %v106, %v110
    %v112 = vlaneseq
    %v113 = vshrl.u32 %v112, 7
    %v114 = vsub.s32 1, %v113
    %v115 = vrot.slane %v106, %v114
    %v116 = vlaneseq
    %v117 = vshrl.u32 %v116, 7
    %v118 = vsub.s32 2, %v117
    %v119 = vrot.slane %v106, %v118
    %v120 = vlaneseq
    %v121 = vshrl.u32 %v120, 7
    %v122 = vsub.s32 3, %v121
    %v123 = vrot.slane %v106, %v122
    %v160 = vunpack.c.l.b16 %v74
    %v161 = vunpack.c.h.b16 %v74
    %v162 = vunpack.c.l.b16 %v75
    %v163 = vunpack.c.h.b16 %v75
    %v164 = vunpack.c.l.b16 %v76
    %v165 = vunpack.c.h.b16 %v76
    %v166 = vunpack.c.l.b16 %v77
    %v167 = vunpack.c.h.b16 %v77
    %v168 = vunpack.c.l.b16 %v78
    %v169 = vunpack.c.h.b16 %v78
    %v170 = vunpack.c.l.b16 %v79
    %v171 = vunpack.c.h.b16 %v79
    %v172 = vunpack.c.l.b16 %v80
    %v173 = vunpack.c.h.b16 %v80
    %v174 = vunpack.c.l.b16 %v81
    %v175 = vunpack.c.h.b16 %v81
    %v176 = vunpack.c.l.b16 %v82
    %v177 = vunpack.c.h.b16 %v82
    %v178 = vunpack.c.l.b16 %v83
    %v179 = vunpack.c.h.b16 %v83
    %v180 = vunpack.c.l.b16 %v84
    %v181 = vunpack.c.h.b16 %v84
    %v182 = vunpack.c.l.b16 %v85
    %v183 = vunpack.c.h.b16 %v85
    %v184 = vunpack.c.l.b16 %v86
    %v185 = vunpack.c.h.b16 %v86
    %v186 = vunpack.c.l.b16 %v87
    %v187 = vunpack.c.h.b16 %v87
    %v188 = vunpack.c.l.b16 %v88
    %v189 = vunpack.c.h.b16 %v88
    %v190 = vunpack.c.l.b16 %v89
    %v191 = vunpack.c.h.b16 %v89
    %v192 = vunpack.c.l.b16 %v90
    %v193 = vunpack.c.h.b16 %v90
    %v194 = vunpack.c.l.b16 %v91
    %v195 = vunpack.c.h.b16 %v91
    %v196 = vunpack.c.l.b16 %v92
    %v197 = vunpack.c.h.b16 %v92
    %v198 = vunpack.c.l.b16 %v93
    %v199 = vunpack.c.h.b16 %v93
    %v200 = vunpack.c.l.b16 %v94
    %v201 = vunpack.c.h.b16 %v94
    %v202 = vunpack.c.l.b16 %v95
    %v203 = vunpack.c.h.b16 %v95
    %v204 = vunpack.c.l.b16 %v96
    %v205 = vunpack.c.h.b16 %v96
    %v206 = vunpack.c.l.b16 %v97
    %v207 = vunpack.c.h.b16 %v97
    %v208 = vunpack.c.l.b16 %v98
    %v209 = vunpack.c.h.b16 %v98
    %v210 = vunpack.c.l.b16 %v99
    %v211 = vunpack.c.h.b16 %v99
    %v212 = vunpack.c.l.b16 %v100
    %v213 = vunpack.c.h.b16 %v100
    %v214 = vunpack.c.l.b16 %v101
    %v215 = vunpack.c.h.b16 %v101
    %v216 = vunpack.c.l.b16 %v102
    %v217 = vunpack.c.h.b16 %v102
    %v218 = vunpack.c.l.b16 %v103
    %v219 = vunpack.c.h.b16 %v103
    %v220 = vunpack.c.l.b16 %v104
    %v221 = vunpack.c.h.b16 %v104
    %v222 = vunpack.c.l.b16 %v105
    %v223 = vunpack.c.h.b16 %v105
    %v224 = vpack.c.b16 %v164, %v160
    %v225 = vpack.c.b16 %v165, %v161
    %v226 = vpack.c.b16 %v166, %v162
    %v227 = vpack.c.b16 %v167, %v163
    %v228 = vpack.c.b16 %v172, %v168
    %v229 = vpack.c.b16 %v173, %v169
    %v230 = vpack.c.b16 %v174, %v170
    %v231 = vpack.c.b16 %v175, %v171
    %v232 = vpack.c.b16 %v180, %v176
    %v233 = vpack.c.b16 %v181, %v177
    %v234 = vpack.c.b16 %v182, %v178
    %v235 = vpack.c.b16 %v183, %v179
    %v236 = vpack.c.b16 %v188, %v184
    %v237 = vpack.c.b16 %v189, %v185
    %v238 = vpack.c.b16 %v190, %v186
    %v239 = vpack.c.b16 %v191, %v187
    %v240 = vpack.c.b16 %v196, %v192
    %v241 = vpack.c.b16 %v197, %v193
    %v242 = vpack.c.b16 %v198, %v194
    %v243 = vpack.c.b16 %v199, %v195
    %v244 = vpack.c.b16 %v204, %v200
    %v245 = vpack.c.b16 %v205, %v201
    %v246 = vpack.c.b16 %v206, %v202
    %v247 = vpack.c.b16 %v207, %v203
    %v248 = vpack.c.b16 %v212, %v208
    %v249 = vpack.c.b16 %v213, %v209
    %v250 = vpack.c.b16 %v214, %v210
    %v251 = vpack.c.b16 %v215, %v211
    %v252 = vpack.c.b16 %v220, %v216
    %v253 = vpack.c.b16 %v221, %v217
    %v254 = vpack.c.b16 %v222, %v218
    %v255 = vpack.c.b16 %v223, %v219
    %288 = vmatprep.subr.bf16.mxu0 %v253
    %289 = vmatpush1.bf16.msra.mxu0 %v252
    %290 = vmatprep.subr.bf16.mxu0 %v249
    %291 = vmatpush1.bf16.msra.mxu0 %v248
    %292 = vmatprep.subr.bf16.mxu0 %v245
    %293 = vmatpush1.bf16.msra.mxu0 %v244
    %294 = vmatprep.subr.bf16.mxu0 %v241
    %295 = vmatpush1.bf16.msra.mxu0 %v240
    %296 = vmatprep.subr.bf16.mxu0 %v237
    %297 = vmatpush1.bf16.msra.mxu0 %v236
    %298 = vmatprep.subr.bf16.mxu0 %v233
    %299 = vmatpush1.bf16.msra.mxu0 %v232
    %300 = vmatprep.subr.bf16.mxu0 %v229
    %301 = vmatpush1.bf16.msra.mxu0 %v228
    %302 = vmatprep.subr.bf16.mxu0 %v225
    %303 = vmatpush1.bf16.msra.mxu0 %v224
    %304 = vmatprep.subr.bf16.mxu0 0
    %305 = vmatpush2.bf16.msra.mxu0 0
    %306 = vmatprep.subr.bf16.mxu0 0
    %307 = vmatpush2.bf16.msra.mxu0 0
    %308 = vmatprep.subr.bf16.mxu0 0
    %309 = vmatpush2.bf16.msra.mxu0 0
    %310 = vmatprep.subr.bf16.mxu0 0
    %311 = vmatpush2.bf16.msra.mxu0 0
    %312 = vmatprep.subr.bf16.mxu0 0
    %313 = vmatpush2.bf16.msra.mxu0 0
    %314 = vmatprep.subr.bf16.mxu0 0
    %315 = vmatpush2.bf16.msra.mxu0 0
    %316 = vmatprep.subr.bf16.mxu0 0
    %317 = vmatpush2.bf16.msra.mxu0 0
    %318 = vmatprep.subr.bf16.mxu0 0
    %319 = vmatpush2.bf16.msra.mxu0 0
    %320 = vmatprep.mubr.bf16.mxu0 0
    %321 = vmatmul.mubr.bf16.gmra.mxu0 %v73
    %v322 = vpop.f32.mrf.mxu0
    %v323 = vadd.f32 %v111, %v322
    %v324 = vpop.f32.mrf.mxu0
    %v325 = vadd.f32 %v115, %v324
    %v326 = vpop.f32.mrf.mxu0
    %v327 = vpop.f32.mrf.mxu0
    %328 = vdwg.mxu0
    %329 = vmatprep.subr.bf16.mxu0 %v255
    %330 = vmatpush1.bf16.msra.mxu0 %v254
    %331 = vmatprep.subr.bf16.mxu0 %v251
    %332 = vmatpush1.bf16.msra.mxu0 %v250
    %333 = vmatprep.subr.bf16.mxu0 %v247
    %334 = vmatpush1.bf16.msra.mxu0 %v246
    %335 = vmatprep.subr.bf16.mxu0 %v243
    %336 = vmatpush1.bf16.msra.mxu0 %v242
    %337 = vmatprep.subr.bf16.mxu0 %v239
    %338 = vmatpush1.bf16.msra.mxu0 %v238
    %339 = vmatprep.subr.bf16.mxu0 %v235
    %340 = vmatpush1.bf16.msra.mxu0 %v234
    %341 = vmatprep.subr.bf16.mxu0 %v231
    %342 = vmatpush1.bf16.msra.mxu0 %v230
    %343 = vmatprep.subr.bf16.mxu0 %v227
    %344 = vmatpush1.bf16.msra.mxu0 %v226
    %345 = vmatprep.subr.bf16.mxu0 0
    %346 = vmatpush2.bf16.msra.mxu0 0
    %347 = vmatprep.subr.bf16.mxu0 0
    %348 = vmatpush2.bf16.msra.mxu0 0
    %349 = vmatprep.subr.bf16.mxu0 0
    %350 = vmatpush2.bf16.msra.mxu0 0
    %351 = vmatprep.subr.bf16.mxu0 0
    %352 = vmatpush2.bf16.msra.mxu0 0
    %353 = vmatprep.subr.bf16.mxu0 0
    %354 = vmatpush2.bf16.msra.mxu0 0
    %355 = vmatprep.subr.bf16.mxu0 0
    %356 = vmatpush2.bf16.msra.mxu0 0
    %357 = vmatprep.subr.bf16.mxu0 0
    %358 = vmatpush2.bf16.msra.mxu0 0
    %359 = vmatprep.subr.bf16.mxu0 0
    %360 = vmatpush2.bf16.msra.mxu0 0
    %361 = vmatprep.mubr.bf16.mxu0 0
    %362 = vmatmul.mubr.bf16.gmra.mxu0 %v73
    %v363 = vpop.f32.mrf.mxu0
    %v364 = vadd.f32 %v119, %v363
    %v365 = vpop.f32.mrf.mxu0
    %v366 = vadd.f32 %v123, %v365
    %v367 = vpop.f32.mrf.mxu0
    %v368 = vpop.f32.mrf.mxu0
    %369 = vdwg.mxu0
    %v370 = vmax.f32 %v323, 0.0
    %v371 = vmax.f32 %v325, 0.0
    %v372 = vmax.f32 %v364, 0.0
    %v373 = vmax.f32 %v366, 0.0
    %v374 = vpack.c.bf16 %v370, %v370
    %v375 = vpack.c.bf16 %v371, %v371
    %v376 = vpack.c.bf16 %v372, %v372
    %v377 = vpack.c.bf16 %v373, %v373
    %v378 = vld [vmem:[#allocation8] sm:$0xff]
    %v379 = vld [vmem:[#allocation8 + $0x8] sm:$0xff]
    %v380 = vld [vmem:[#allocation8 + $0x10] sm:$0xff]
    %v381 = vld [vmem:[#allocation8 + $0x18] sm:$0xff]
    %v382 = vld [vmem:[#allocation8 + $0x20] sm:$0xff]
    %v383 = vld [vmem:[#allocation8 + $0x28] sm:$0xff]
    %v384 = vld [vmem:[#allocation8 + $0x30] sm:$0xff]
    %v385 = vld [vmem:[#allocation8 + $0x38] sm:$0xff]
    %v386 = vld [vmem:[#allocation8 + $0x40] sm:$0xff]
    %v387 = vld [vmem:[#allocation8 + $0x48] sm:$0xff]
    %v388 = vld [vmem:[#allocation8 + $0x50] sm:$0xff]
    %v389 = vld [vmem:[#allocation8 + $0x58] sm:$0xff]
    %v390 = vld [vmem:[#allocation8 + $0x60] sm:$0xff]
    %v391 = vld [vmem:[#allocation8 + $0x68] sm:$0xff]
    %v392 = vld [vmem:[#allocation8 + $0x70] sm:$0xff]
    %v393 = vld [vmem:[#allocation8 + $0x78] sm:$0xff]
    %v394 = vld [vmem:[#allocation8 + $0x80] sm:$0xff]
    %v395 = vld [vmem:[#allocation8 + $0x88] sm:$0xff]
    %v396 = vld [vmem:[#allocation8 + $0x90] sm:$0xff]
    %v397 = vld [vmem:[#allocation8 + $0x98] sm:$0xff]
    %v398 = vld [vmem:[#allocation8 + $0xa0] sm:$0xff]
    %v399 = vld [vmem:[#allocation8 + $0xa8] sm:$0xff]
    %v400 = vld [vmem:[#allocation8 + $0xb0] sm:$0xff]
    %v401 = vld [vmem:[#allocation8 + $0xb8] sm:$0xff]
    %v402 = vld [vmem:[#allocation8 + $0xc0] sm:$0xff]
    %v403 = vld [vmem:[#allocation8 + $0xc8] sm:$0xff]
    %v404 = vld [vmem:[#allocation8 + $0xd0] sm:$0xff]
    %v405 = vld [vmem:[#allocation8 + $0xd8] sm:$0xff]
    %v406 = vld [vmem:[#allocation8 + $0xe0] sm:$0xff]
    %v407 = vld [vmem:[#allocation8 + $0xe8] sm:$0xff]
    %v408 = vld [vmem:[#allocation8 + $0xf0] sm:$0xff]
    %v409 = vld [vmem:[#allocation8 + $0xf8] sm:$0xff]
    %v410 = vld [vmem:[#allocation8 + $0x100] sm:$0xff]
    %v411 = vld [vmem:[#allocation8 + $0x108] sm:$0xff]
    %v412 = vld [vmem:[#allocation8 + $0x110] sm:$0xff]
    %v413 = vld [vmem:[#allocation8 + $0x118] sm:$0xff]
    %v414 = vld [vmem:[#allocation8 + $0x120] sm:$0xff]
    %v415 = vld [vmem:[#allocation8 + $0x128] sm:$0xff]
    %v416 = vld [vmem:[#allocation8 + $0x130] sm:$0xff]
    %v417 = vld [vmem:[#allocation8 + $0x138] sm:$0xff]
    %v418 = vld [vmem:[#allocation8 + $0x140] sm:$0xff]
    %v419 = vld [vmem:[#allocation8 + $0x148] sm:$0xff]
    %v420 = vld [vmem:[#allocation8 + $0x150] sm:$0xff]
    %v421 = vld [vmem:[#allocation8 + $0x158] sm:$0xff]
    %v422 = vld [vmem:[#allocation8 + $0x160] sm:$0xff]
    %v423 = vld [vmem:[#allocation8 + $0x168] sm:$0xff]
    %v424 = vld [vmem:[#allocation8 + $0x170] sm:$0xff]
    %v425 = vld [vmem:[#allocation8 + $0x178] sm:$0xff]
    %v426 = vld [vmem:[#allocation8 + $0x180] sm:$0xff]
    %v427 = vld [vmem:[#allocation8 + $0x188] sm:$0xff]
    %v428 = vld [vmem:[#allocation8 + $0x190] sm:$0xff]
    %v429 = vld [vmem:[#allocation8 + $0x198] sm:$0xff]
    %v430 = vld [vmem:[#allocation8 + $0x1a0] sm:$0xff]
    %v431 = vld [vmem:[#allocation8 + $0x1a8] sm:$0xff]
    %v432 = vld [vmem:[#allocation8 + $0x1b0] sm:$0xff]
    %v433 = vld [vmem:[#allocation8 + $0x1b8] sm:$0xff]
    %v434 = vld [vmem:[#allocation8 + $0x1c0] sm:$0xff]
    %v435 = vld [vmem:[#allocation8 + $0x1c8] sm:$0xff]
    %v436 = vld [vmem:[#allocation8 + $0x1d0] sm:$0xff]
    %v437 = vld [vmem:[#allocation8 + $0x1d8] sm:$0xff]
    %v438 = vld [vmem:[#allocation8 + $0x1e0] sm:$0xff]
    %v439 = vld [vmem:[#allocation8 + $0x1e8] sm:$0xff]
    %v440 = vld [vmem:[#allocation8 + $0x1f0] sm:$0xff]
    %v441 = vld [vmem:[#allocation8 + $0x1f8] sm:$0xff]
    %v442 = vld [vmem:[%s4] sm:$0x3]
    %v444 = vlaneseq
    %v445 = vshrl.u32 %v444, 7
    %v446 = vsub.s32 0, %v445
    %v447 = vrot.slane %v442, %v446
    %v448 = vlaneseq
    %v449 = vshrl.u32 %v448, 7
    %v450 = vsub.s32 1, %v449
    %v451 = vrot.slane %v442, %v450
    %v518 = vunpack.c.l.b16 %v378
    %v519 = vunpack.c.h.b16 %v378
    %v520 = vunpack.c.l.b16 %v379
    %v521 = vunpack.c.h.b16 %v379
    %v522 = vunpack.c.l.b16 %v380
    %v523 = vunpack.c.h.b16 %v380
    %v524 = vunpack.c.l.b16 %v381
    %v525 = vunpack.c.h.b16 %v381
    %v526 = vunpack.c.l.b16 %v382
    %v527 = vunpack.c.h.b16 %v382
    %v528 = vunpack.c.l.b16 %v383
    %v529 = vunpack.c.h.b16 %v383
    %v530 = vunpack.c.l.b16 %v384
    %v531 = vunpack.c.h.b16 %v384
    %v532 = vunpack.c.l.b16 %v385
    %v533 = vunpack.c.h.b16 %v385
    %v534 = vunpack.c.l.b16 %v386
    %v535 = vunpack.c.h.b16 %v386
    %v536 = vunpack.c.l.b16 %v387
    %v537 = vunpack.c.h.b16 %v387
    %v538 = vunpack.c.l.b16 %v388
    %v539 = vunpack.c.h.b16 %v388
    %v540 = vunpack.c.l.b16 %v389
    %v541 = vunpack.c.h.b16 %v389
    %v542 = vunpack.c.l.b16 %v390
    %v543 = vunpack.c.h.b16 %v390
    %v544 = vunpack.c.l.b16 %v391
    %v545 = vunpack.c.h.b16 %v391
    %v546 = vunpack.c.l.b16 %v392
    %v547 = vunpack.c.h.b16 %v392
    %v548 = vunpack.c.l.b16 %v393
    %v549 = vunpack.c.h.b16 %v393
    %v550 = vunpack.c.l.b16 %v394
    %v551 = vunpack.c.h.b16 %v394
    %v552 = vunpack.c.l.b16 %v395
    %v553 = vunpack.c.h.b16 %v395
    %v554 = vunpack.c.l.b16 %v396
    %v555 = vunpack.c.h.b16 %v396
    %v556 = vunpack.c.l.b16 %v397
    %v557 = vunpack.c.h.b16 %v397
    %v558 = vunpack.c.l.b16 %v398
    %v559 = vunpack.c.h.b16 %v398
    %v560 = vunpack.c.l.b16 %v399
    %v561 = vunpack.c.h.b16 %v399
    %v562 = vunpack.c.l.b16 %v400
    %v563 = vunpack.c.h.b16 %v400
    %v564 = vunpack.c.l.b16 %v401
    %v565 = vunpack.c.h.b16 %v401
    %v566 = vunpack.c.l.b16 %v402
    %v567 = vunpack.c.h.b16 %v402
    %v568 = vunpack.c.l.b16 %v403
    %v569 = vunpack.c.h.b16 %v403
    %v570 = vunpack.c.l.b16 %v404
    %v571 = vunpack.c.h.b16 %v404
    %v572 = vunpack.c.l.b16 %v405
    %v573 = vunpack.c.h.b16 %v405
    %v574 = vunpack.c.l.b16 %v406
    %v575 = vunpack.c.h.b16 %v406
    %v576 = vunpack.c.l.b16 %v407
    %v577 = vunpack.c.h.b16 %v407
    %v578 = vunpack.c.l.b16 %v408
    %v579 = vunpack.c.h.b16 %v408
    %v580 = vunpack.c.l.b16 %v409
    %v581 = vunpack.c.h.b16 %v409
    %v582 = vunpack.c.l.b16 %v410
    %v583 = vunpack.c.h.b16 %v410
    %v584 = vunpack.c.l.b16 %v411
    %v585 = vunpack.c.h.b16 %v411
    %v586 = vunpack.c.l.b16 %v412
    %v587 = vunpack.c.h.b16 %v412
    %v588 = vunpack.c.l.b16 %v413
    %v589 = vunpack.c.h.b16 %v413
    %v590 = vunpack.c.l.b16 %v414
    %v591 = vunpack.c.h.b16 %v414
    %v592 = vunpack.c.l.b16 %v415
    %v593 = vunpack.c.h.b16 %v415
    %v594 = vunpack.c.l.b16 %v416
    %v595 = vunpack.c.h.b16 %v416
    %v596 = vunpack.c.l.b16 %v417
    %v597 = vunpack.c.h.b16 %v417
    %v598 = vunpack.c.l.b16 %v418
    %v599 = vunpack.c.h.b16 %v418
    %v600 = vunpack.c.l.b16 %v419
    %v601 = vunpack.c.h.b16 %v419
    %v602 = vunpack.c.l.b16 %v420
    %v603 = vunpack.c.h.b16 %v420
    %v604 = vunpack.c.l.b16 %v421
    %v605 = vunpack.c.h.b16 %v421
    %v606 = vunpack.c.l.b16 %v422
    %v607 = vunpack.c.h.b16 %v422
    %v608 = vunpack.c.l.b16 %v423
    %v609 = vunpack.c.h.b16 %v423
    %v610 = vunpack.c.l.b16 %v424
    %v611 = vunpack.c.h.b16 %v424
    %v612 = vunpack.c.l.b16 %v425
    %v613 = vunpack.c.h.b16 %v425
    %v614 = vunpack.c.l.b16 %v426
    %v615 = vunpack.c.h.b16 %v426
    %v616 = vunpack.c.l.b16 %v427
    %v617 = vunpack.c.h.b16 %v427
    %v618 = vunpack.c.l.b16 %v428
    %v619 = vunpack.c.h.b16 %v428
    %v620 = vunpack.c.l.b16 %v429
    %v621 = vunpack.c.h.b16 %v429
    %v622 = vunpack.c.l.b16 %v430
    %v623 = vunpack.c.h.b16 %v430
    %v624 = vunpack.c.l.b16 %v431
    %v625 = vunpack.c.h.b16 %v431
    %v626 = vunpack.c.l.b16 %v432
    %v627 = vunpack.c.h.b16 %v432
    %v628 = vunpack.c.l.b16 %v433
    %v629 = vunpack.c.h.b16 %v433
    %v630 = vunpack.c.l.b16 %v434
    %v631 = vunpack.c.h.b16 %v434
    %v632 = vunpack.c.l.b16 %v435
    %v633 = vunpack.c.h.b16 %v435
    %v634 = vunpack.c.l.b16 %v436
    %v635 = vunpack.c.h.b16 %v436
    %v636 = vunpack.c.l.b16 %v437
    %v637 = vunpack.c.h.b16 %v437
    %v638 = vunpack.c.l.b16 %v438
    %v639 = vunpack.c.h.b16 %v438
    %v640 = vunpack.c.l.b16 %v439
    %v641 = vunpack.c.h.b16 %v439
    %v642 = vunpack.c.l.b16 %v440
    %v643 = vunpack.c.h.b16 %v440
    %v644 = vunpack.c.l.b16 %v441
    %v645 = vunpack.c.h.b16 %v441
    %v646 = vpack.c.b16 %v520, %v518
    %v647 = vpack.c.b16 %v521, %v519
    %v648 = vpack.c.b16 %v524, %v522
    %v649 = vpack.c.b16 %v525, %v523
    %v650 = vpack.c.b16 %v528, %v526
    %v651 = vpack.c.b16 %v529, %v527
    %v652 = vpack.c.b16 %v532, %v530
    %v653 = vpack.c.b16 %v533, %v531
    %v654 = vpack.c.b16 %v536, %v534
    %v655 = vpack.c.b16 %v537, %v535
    %v656 = vpack.c.b16 %v540, %v538
    %v657 = vpack.c.b16 %v541, %v539
    %v658 = vpack.c.b16 %v544, %v542
    %v659 = vpack.c.b16 %v545, %v543
    %v660 = vpack.c.b16 %v548, %v546
    %v661 = vpack.c.b16 %v549, %v547
    %v662 = vpack.c.b16 %v552, %v550
    %v663 = vpack.c.b16 %v553, %v551
    %v664 = vpack.c.b16 %v556, %v554
    %v665 = vpack.c.b16 %v557, %v555
    %v666 = vpack.c.b16 %v560, %v558
    %v667 = vpack.c.b16 %v561, %v559
    %v668 = vpack.c.b16 %v564, %v562
    %v669 = vpack.c.b16 %v565, %v563
    %v670 = vpack.c.b16 %v568, %v566
    %v671 = vpack.c.b16 %v569, %v567
    %v672 = vpack.c.b16 %v572, %v570
    %v673 = vpack.c.b16 %v573, %v571
    %v674 = vpack.c.b16 %v576, %v574
    %v675 = vpack.c.b16 %v577, %v575
    %v676 = vpack.c.b16 %v580, %v578
    %v677 = vpack.c.b16 %v581, %v579
    %v678 = vpack.c.b16 %v584, %v582
    %v679 = vpack.c.b16 %v585, %v583
    %v680 = vpack.c.b16 %v588, %v586
    %v681 = vpack.c.b16 %v589, %v587
    %v682 = vpack.c.b16 %v592, %v590
    %v683 = vpack.c.b16 %v593, %v591
    %v684 = vpack.c.b16 %v596, %v594
    %v685 = vpack.c.b16 %v597, %v595
    %v686 = vpack.c.b16 %v600, %v598
    %v687 = vpack.c.b16 %v601, %v599
    %v688 = vpack.c.b16 %v604, %v602
    %v689 = vpack.c.b16 %v605, %v603
    %v690 = vpack.c.b16 %v608, %v606
    %v691 = vpack.c.b16 %v609, %v607
    %v692 = vpack.c.b16 %v612, %v610
    %v693 = vpack.c.b16 %v613, %v611
    %v694 = vpack.c.b16 %v616, %v614
    %v695 = vpack.c.b16 %v617, %v615
    %v696 = vpack.c.b16 %v620, %v618
    %v697 = vpack.c.b16 %v621, %v619
    %v698 = vpack.c.b16 %v624, %v622
    %v699 = vpack.c.b16 %v625, %v623
    %v700 = vpack.c.b16 %v628, %v626
    %v701 = vpack.c.b16 %v629, %v627
    %v702 = vpack.c.b16 %v632, %v630
    %v703 = vpack.c.b16 %v633, %v631
    %v704 = vpack.c.b16 %v636, %v634
    %v705 = vpack.c.b16 %v637, %v635
    %v706 = vpack.c.b16 %v640, %v638
    %v707 = vpack.c.b16 %v641, %v639
    %v708 = vpack.c.b16 %v644, %v642
    %v709 = vpack.c.b16 %v645, %v643
    %774 = vmatprep.subr.bf16.mxu0 %v661
    %775 = vmatpush1.bf16.msra.mxu0 %v660
    %776 = vmatprep.subr.bf16.mxu0 %v659
    %777 = vmatpush1.bf16.msra.mxu0 %v658
    %778 = vmatprep.subr.bf16.mxu0 %v657
    %779 = vmatpush1.bf16.msra.mxu0 %v656
    %780 = vmatprep.subr.bf16.mxu0 %v655
    %781 = vmatpush1.bf16.msra.mxu0 %v654
    %782 = vmatprep.subr.bf16.mxu0 %v653
    %783 = vmatpush1.bf16.msra.mxu0 %v652
    %784 = vmatprep.subr.bf16.mxu0 %v651
    %785 = vmatpush1.bf16.msra.mxu0 %v650
    %786 = vmatprep.subr.bf16.mxu0 %v649
    %787 = vmatpush1.bf16.msra.mxu0 %v648
    %788 = vmatprep.subr.bf16.mxu0 %v647
    %789 = vmatpush1.bf16.msra.mxu0 %v646
    %790 = vmatprep.subr.bf16.mxu0 %v677
    %791 = vmatpush2.bf16.msra.mxu0 %v676
    %792 = vmatprep.subr.bf16.mxu0 %v675
    %793 = vmatpush2.bf16.msra.mxu0 %v674
    %794 = vmatprep.subr.bf16.mxu0 %v673
    %795 = vmatpush2.bf16.msra.mxu0 %v672
    %796 = vmatprep.subr.bf16.mxu0 %v671
    %797 = vmatpush2.bf16.msra.mxu0 %v670
    %798 = vmatprep.subr.bf16.mxu0 %v669
    %799 = vmatpush2.bf16.msra.mxu0 %v668
    %800 = vmatprep.subr.bf16.mxu0 %v667
    %801 = vmatpush2.bf16.msra.mxu0 %v666
    %802 = vmatprep.subr.bf16.mxu0 %v665
    %803 = vmatpush2.bf16.msra.mxu0 %v664
    %804 = vmatprep.subr.bf16.mxu0 %v663
    %805 = vmatpush2.bf16.msra.mxu0 %v662
    %806 = vmatprep.mubr.bf16.mxu0 %v375
    %807 = vmatmul.mubr.bf16.gmra.mxu0 %v374
    %v808 = vpop.f32.mrf.mxu0
    %v809 = vadd.f32 %v447, %v808
    %v810 = vpop.f32.mrf.mxu0
    %v811 = vadd.f32 %v451, %v810
    %v812 = vpop.f32.mrf.mxu0
    %v813 = vpop.f32.mrf.mxu0
    %814 = vdwg.mxu0
    %815 = vmatprep.subr.bf16.mxu0 %v693
    %816 = vmatpush1.bf16.msra.mxu0 %v692
    %817 = vmatprep.subr.bf16.mxu0 %v691
    %818 = vmatpush1.bf16.msra.mxu0 %v690
    %819 = vmatprep.subr.bf16.mxu0 %v689
    %820 = vmatpush1.bf16.msra.mxu0 %v688
    %821 = vmatprep.subr.bf16.mxu0 %v687
    %822 = vmatpush1.bf16.msra.mxu0 %v686
    %823 = vmatprep.subr.bf16.mxu0 %v685
    %824 = vmatpush1.bf16.msra.mxu0 %v684
    %825 = vmatprep.subr.bf16.mxu0 %v683
    %826 = vmatpush1.bf16.msra.mxu0 %v682
    %827 = vmatprep.subr.bf16.mxu0 %v681
    %828 = vmatpush1.bf16.msra.mxu0 %v680
    %829 = vmatprep.subr.bf16.mxu0 %v679
    %830 = vmatpush1.bf16.msra.mxu0 %v678
    %831 = vmatprep.subr.bf16.mxu0 %v709
    %832 = vmatpush2.bf16.msra.mxu0 %v708
    %833 = vmatprep.subr.bf16.mxu0 %v707
    %834 = vmatpush2.bf16.msra.mxu0 %v706
    %835 = vmatprep.subr.bf16.mxu0 %v705
    %836 = vmatpush2.bf16.msra.mxu0 %v704
    %837 = vmatprep.subr.bf16.mxu0 %v703
    %838 = vmatpush2.bf16.msra.mxu0 %v702
    %839 = vmatprep.subr.bf16.mxu0 %v701
    %840 = vmatpush2.bf16.msra.mxu0 %v700
    %841 = vmatprep.subr.bf16.mxu0 %v699
    %842 = vmatpush2.bf16.msra.mxu0 %v698
    %843 = vmatprep.subr.bf16.mxu0 %v697
    %844 = vmatpush2.bf16.msra.mxu0 %v696
    %845 = vmatprep.subr.bf16.mxu0 %v695
    %846 = vmatpush2.bf16.msra.mxu0 %v694
    %847 = vmatprep.mubr.bf16.mxu0 %v377
    %848 = vmatmul.mubr.bf16.gmra.mxu0 %v376
    %v849 = vpop.f32.mrf.mxu0
    %v850 = vadd.f32 %v809, %v849
    %v851 = vpop.f32.mrf.mxu0
    %v852 = vadd.f32 %v811, %v851
    %v853 = vpop.f32.mrf.mxu0
    %v854 = vpop.f32.mrf.mxu0
    %855 = vdwg.mxu0
    %v856 = vmax.f32 %v850, 0.0
    %v857 = vmax.f32 %v852, 0.0
    %858 = vst [vmem:[#allocation10] sm:$0xff] %v856
    %859 = vst [vmem:[#allocation10 + $0x8] sm:$0xff] %v857
    // Predicated region
    $region38: #{tpu_custom_call.1} parent=1 // pred_check
      _
    $region39: #{tpu_custom_call.1} parent=1 // pred_check_branch
      %861 = sbr.rel (0) target = $region41
    $region40: #{tpu_custom_call.1} parent=1 // pred_region
      %s863 = ssub.s32 256, 256
      %864 = vsyncadd [#allocation4], %s863
      %s866 = sshll.u32 [#allocation10], 4
      %s867 = int_to_ptr.vmem [resolvable:$true] %s866
      %869 = dma.vmem_to_hbm [thread:$0]  %s867, 256, %s5, [#allocation4]
    $region41: #{tpu_custom_call.1} parent=1 // pred_fallthru
      _
    // Predicated region
    $region42: #{tpu_custom_call.1} parent=1 // pred_check
      _
    $region43: #{tpu_custom_call.1} parent=1 // pred_check_branch
      %871 = sbr.rel (0) target = $region45
    $region44: #{tpu_custom_call.1} parent=1 // pred_region
      %872 = dma.done [#allocation4], 256
    $region45: #{tpu_custom_call.1} parent=1 // pred_fallthru
      _
    %873 = vsyncpa [#allocation3], 1
    %874 = vsyncpa [#allocation6], 1
    %875 = vsyncpa [#allocation9], 1
    %876 = vsyncpa [#allocation4], 1

</llo_original>
